<compile_context>
chip_gen: v5e
topology: v5e:2x2
jax: 0.10.0
libtpu: 0.0.40
codegen_flags: <defaults>
</compile_context>

<pallas_src>
import functools
import math

import jax
import jax.numpy as jnp
from jax.experimental import pallas as pl
from jax.experimental.pallas import tpu as pltpu


def _mha_kernel(x_ref, wq_ref, wk_ref, wv_ref, wo_ref, o_ref, *,
                n_heads, key_dim, val_dim, lowp_dtype):
    bb, n, d_in = x_ref.shape
    e = o_ref.shape[-1]

    x2 = x_ref[...].reshape(bb * n, d_in)                       # (bb*N, D_in)
    out_acc = jnp.zeros((bb * n, e), jnp.float32)

    # Per-head loop (H is compile-time; statically unrolled).  All head
    # selection is leading-axis ref indexing -> no lane slicing / relayouts.
    for h in range(n_heads):
        # Projections; norm_factor is already folded into wq by the wrapper.
        q = jnp.dot(x2, wq_ref[h], preferred_element_type=jnp.float32)
        k = jnp.dot(x2, wk_ref[h], preferred_element_type=jnp.float32)
        v = jnp.dot(x2, wv_ref[h], preferred_element_type=jnp.float32)
        q3 = q.reshape(bb, n, key_dim)                           # (bb, N, Dk)
        k3 = k.reshape(bb, n, key_dim)
        v3 = v.reshape(bb, n, val_dim)                           # (bb, N, Dv)

        # scores = (norm * Q) @ K^T, contracting Dk (no materialized K^T).
        s = jnp.einsum('bqd,bkd->bqk', q3, k3,
                       preferred_element_type=jnp.float32)       # (bb, N, N)
        # TODO(synk): optional multiplicative mask not implemented here.
        s = s - jnp.max(s, axis=-1, keepdims=True)
        p = jnp.exp(s)
        attn = p * pl.reciprocal(jnp.sum(p, axis=-1, keepdims=True),
                                 approx=True)

        # attn @ V with low-precision MXU feeds, f32 accumulation.
        ctx = jnp.einsum('bqk,bkd->bqd',
                         attn.astype(lowp_dtype), v3.astype(lowp_dtype),
                         preferred_element_type=jnp.float32)     # (bb, N, Dv)

        # Output projection accumulated per head (no lane-axis concat).
        out_acc = out_acc + jnp.dot(
            ctx.reshape(bb * n, val_dim).astype(lowp_dtype), wo_ref[h],
            preferred_element_type=jnp.float32)                  # (bb*N, E)

    o_ref[...] = out_acc.reshape(bb, n, e).astype(o_ref.dtype)


def multi_head_attention(x, w_query, w_key, w_val, w_out, norm_factor, *,
                         target_rows=512, use_bf16_mxu=True,
                         vmem_budget_bytes=24 * 1024 * 1024):
    """x: (B, N, D_in); weights in the PyTorch per-head layout.
    Returns (B, N, E) in x.dtype."""
    B, N, D_in = x.shape
    H, _, Dk = w_query.shape
    Dv = w_val.shape[-1]
    E = w_out.shape[-1]
    out_dtype = x.dtype
    lowp_dtype = jnp.bfloat16 if use_bf16_mxu else x.dtype

    # Head-major weights, VMEM-resident across the whole grid.
    wq = (w_query * norm_factor).astype(x.dtype)   # norm_factor folded in
    wk = w_key.astype(x.dtype)
    wv = w_val.astype(x.dtype)
    wo = w_out.astype(lowp_dtype)

    # ---- bb: batch elements per grid step --------------------------------
    bb = max(1, min(B, max(1, target_rows // max(N, 1))))
    if B >= 2:
        bb = min(bb, max(1, B // 2))   # >= 2 grid steps so both v7x TCs work

    def footprint(bb_):
        isz = jnp.dtype(x.dtype).itemsize
        blk_in = bb_ * N * D_in * isz
        blk_out = bb_ * N * E * jnp.dtype(out_dtype).itemsize
        w_bytes = ((2 * H * D_in * Dk + H * D_in * Dv) * isz
                   + H * Dv * E * jnp.dtype(lowp_dtype).itemsize)
        live = (3 * bb_ * N * N * 4            # scores / p / attn (f32)
                + bb_ * N * (2 * Dk + Dv) * 4  # q / k / v (f32)
                + bb_ * N * E * 4)             # output accumulator (f32)
        return 2 * (blk_in + blk_out) + 2 * w_bytes + live

    while bb > 1 and footprint(bb) > vmem_budget_bytes:
        bb = max(1, bb // 2)
    # TODO(synk): if footprint(1) still exceeds the budget, flash-style key
    # tiling (header TODO) is required.

    # Pad B up to a multiple of bb instead of shrinking bb to a divisor of B.
    n_blocks = pl.cdiv(B, bb)
    Bp = n_blocks * bb
    x_p = jnp.pad(x, ((0, Bp - B), (0, 0), (0, 0))) if Bp != B else x

    kernel = functools.partial(_mha_kernel, n_heads=H, key_dim=Dk,
                               val_dim=Dv, lowp_dtype=lowp_dtype)

    out = pl.pallas_call(
        kernel,
        out_shape=jax.ShapeDtypeStruct((Bp, N, E), out_dtype),
        grid_spec=pltpu.PrefetchScalarGridSpec(
            num_scalar_prefetch=0,
            grid=(n_blocks,),
            in_specs=[
                pl.BlockSpec((bb, N, D_in), lambda i: (i, 0, 0)),   # x block
                pl.BlockSpec((H, D_in, Dk), lambda i: (0, 0, 0)),   # Wq (resident)
                pl.BlockSpec((H, D_in, Dk), lambda i: (0, 0, 0)),   # Wk (resident)
                pl.BlockSpec((H, D_in, Dv), lambda i: (0, 0, 0)),   # Wv (resident)
                pl.BlockSpec((H, Dv, E), lambda i: (0, 0, 0)),      # Wo (resident)
            ],
            out_specs=pl.BlockSpec((bb, N, E), lambda i: (i, 0, 0)),
        ),
        compiler_params=pltpu.CompilerParams(
            dimension_semantics=("parallel",),
            vmem_limit_bytes=48 * 1024 * 1024),
    )(x_p, wq, wk, wv, wo)
    return out[:B]


def _init_param(key, shape):
    # Mirrors nn.init: uniform(-stdv, stdv) with stdv = 1/sqrt(last dim).
    stdv = 1.0 / math.sqrt(shape[-1])
    return jax.random.uniform(key, shape, jnp.float32, minval=-stdv, maxval=stdv)


def _reference(x, wq, wk, wv, wo, norm_factor):
    # Pure-JAX reference replicating the PyTorch math exactly (f32).
    B, N, D_in = x.shape
    H, _, Dk = wq.shape
    E = wo.shape[-1]
    flat = x.astype(jnp.float32).reshape(-1, D_in)
    Q = jnp.matmul(flat, wq).reshape(H, B, N, -1)   # broadcast matmul over heads
    K = jnp.matmul(flat, wk).reshape(H, B, N, -1)
    V = jnp.matmul(flat, wv).reshape(H, B, N, -1)
    compat = norm_factor * jnp.matmul(Q, jnp.swapaxes(K, 2, 3))
    attn = jax.nn.softmax(compat, axis=-1)
    heads = jnp.matmul(attn, V)                     # (H, B, N, Dv)
    merged = jnp.transpose(heads, (1, 2, 0, 3)).reshape(B * N, -1)
    return jnp.matmul(merged, wo.reshape(-1, E)).reshape(B, N, E)


if __name__ == "__main__":
    # Module hyper-parameters (small, consistent with the PyTorch __init__).
    n_heads, input_dim, embed_dim = 4, 32, 32
    val_dim = embed_dim // n_heads   # 8
    key_dim = val_dim                # 8
    norm_factor = 1.0 / math.sqrt(key_dim)

    root = jax.random.PRNGKey(0)
    kq, kk, kv, ko, kx = jax.random.split(root, 5)
    w_query = _init_param(kq, (n_heads, input_dim, key_dim))
    w_key = _init_param(kk, (n_heads, input_dim, key_dim))
    w_val = _init_param(kv, (n_heads, input_dim, val_dim))
    w_out = _init_param(ko, (n_heads, val_dim, embed_dim))

    # (batch, graph_size, use_bf16_mxu, atol/rtol)
    configs = [
        (2, 8, False, 2e-3),   # exact-path check (only approx-reciprocal error)
        (5, 8, True, 5e-2),    # exercises batch padding (B not multiple of bb)
        (16, 8, True, 5e-2),   # multi-element blocks (bb=8), bf16 MXU feeds
    ]
    for batch, graph_size, use_bf16, tol in configs:
        kxi = jax.random.fold_in(kx, batch)
        x = jax.random.normal(kxi, (batch, graph_size, input_dim), jnp.float32)

        out = multi_head_attention(x, w_query, w_key, w_val, w_out,
                                   norm_factor, use_bf16_mxu=use_bf16)
        out = jax.block_until_ready(out)

        ref = _reference(x, w_query, w_key, w_val, w_out, norm_factor)
        assert out.shape == (batch, graph_size, embed_dim), out.shape
        assert jnp.all(jnp.isfinite(out)), "non-finite output"
        assert jnp.allclose(out.astype(jnp.float32), ref, atol=tol, rtol=tol), (
            f"mismatch vs JAX reference (B={batch}, bf16={use_bf16})")

    print("KERNEL_OK")
</pallas_src>

<mosaic_0001>
module attributes {stable_mosaic.version = 11 : i64} {
  func.func @_mha_kernel(%arg0: i32, %arg1: memref<1x8x32xf32, #tpu.memory_space<vmem>>, %arg2: memref<4x32x8xf32, #tpu.memory_space<vmem>>, %arg3: memref<4x32x8xf32, #tpu.memory_space<vmem>>, %arg4: memref<4x32x8xf32, #tpu.memory_space<vmem>>, %arg5: memref<4x8x32xf32, #tpu.memory_space<vmem>>, %arg6: memref<1x8x32xf32, #tpu.memory_space<vmem>>) attributes {dimension_semantics = [#tpu.dimension_semantics<parallel>], iteration_bounds = array<i64: 2>, scalar_prefetch = 0 : i64, scratch_operands = 0 : i64, tpu.core_type = #tpu.core_type<tc>, window_params = [{transform_indices = @transform_0, window_bounds = array<i64: 1, 8, 32>}, {pipeline_mode = #tpu.pipeline_mode<synchronous>, transform_indices = @transform_1, window_bounds = array<i64: 4, 32, 8>}, {pipeline_mode = #tpu.pipeline_mode<synchronous>, transform_indices = @transform_2, window_bounds = array<i64: 4, 32, 8>}, {pipeline_mode = #tpu.pipeline_mode<synchronous>, transform_indices = @transform_3, window_bounds = array<i64: 4, 32, 8>}, {pipeline_mode = #tpu.pipeline_mode<synchronous>, transform_indices = @transform_4, window_bounds = array<i64: 4, 8, 32>}, {transform_indices = @transform_5, window_bounds = array<i64: 1, 8, 32>}]} {
    %c0 = arith.constant 0 : index
    %c0_0 = arith.constant 0 : index
    %c0_1 = arith.constant 0 : index
    %0 = vector.load %arg1[%c0, %c0_0, %c0_1] : memref<1x8x32xf32, #tpu.memory_space<vmem>>, vector<1x8x32xf32>
    %1 = vector.shape_cast %0 : vector<1x8x32xf32> to vector<8x32xf32>
    %cst = arith.constant 0.000000e+00 : f32
    %2 = vector.broadcast %cst : f32 to vector<8x32xf32>
    %c0_2 = arith.constant 0 : index
    %c0_3 = arith.constant 0 : index
    %c0_4 = arith.constant 0 : index
    %3 = vector.load %arg2[%c0_2, %c0_3, %c0_4] : memref<4x32x8xf32, #tpu.memory_space<vmem>>, vector<1x32x8xf32>
    %4 = vector.shape_cast %3 : vector<1x32x8xf32> to vector<32x8xf32>
    %cst_5 = arith.constant dense<0.000000e+00> : vector<8x8xf32>
    %5 = tpu.matmul %1, %4, %cst_5 {dimension_numbers = #tpu.dot_dimension_numbers<[1], [0], [0], [1], [0, 0, 1, 1], [], []>} : vector<8x32xf32>, vector<32x8xf32>, vector<8x8xf32> -> vector<8x8xf32>
    %c0_6 = arith.constant 0 : index
    %c0_7 = arith.constant 0 : index
    %c0_8 = arith.constant 0 : index
    %6 = vector.load %arg3[%c0_6, %c0_7, %c0_8] : memref<4x32x8xf32, #tpu.memory_space<vmem>>, vector<1x32x8xf32>
    %7 = vector.shape_cast %6 : vector<1x32x8xf32> to vector<32x8xf32>
    %cst_9 = arith.constant dense<0.000000e+00> : vector<8x8xf32>
    %8 = tpu.matmul %1, %7, %cst_9 {dimension_numbers = #tpu.dot_dimension_numbers<[1], [0], [0], [1], [0, 0, 1, 1], [], []>} : vector<8x32xf32>, vector<32x8xf32>, vector<8x8xf32> -> vector<8x8xf32>
    %c0_10 = arith.constant 0 : index
    %c0_11 = arith.constant 0 : index
    %c0_12 = arith.constant 0 : index
    %9 = vector.load %arg4[%c0_10, %c0_11, %c0_12] : memref<4x32x8xf32, #tpu.memory_space<vmem>>, vector<1x32x8xf32>
    %10 = vector.shape_cast %9 : vector<1x32x8xf32> to vector<32x8xf32>
    %cst_13 = arith.constant dense<0.000000e+00> : vector<8x8xf32>
    %11 = tpu.matmul %1, %10, %cst_13 {dimension_numbers = #tpu.dot_dimension_numbers<[1], [0], [0], [1], [0, 0, 1, 1], [], []>} : vector<8x32xf32>, vector<32x8xf32>, vector<8x8xf32> -> vector<8x8xf32>
    %12 = vector.shape_cast %5 : vector<8x8xf32> to vector<1x8x8xf32>
    %13 = vector.shape_cast %8 : vector<8x8xf32> to vector<1x8x8xf32>
    %14 = vector.shape_cast %11 : vector<8x8xf32> to vector<1x8x8xf32>
    "tpu.trace_start"() <{level = 10 : i32, message = "bqd,bkd->bqk"}> : () -> ()
    %cst_14 = arith.constant dense<0.000000e+00> : vector<1x8x8xf32>
    %15 = tpu.matmul %12, %13, %cst_14 {dimension_numbers = #tpu.dot_dimension_numbers<[2], [2], [1], [1], [0, 0, 0, 1, 1, 1], [0], [0]>} : vector<1x8x8xf32>, vector<1x8x8xf32>, vector<1x8x8xf32> -> vector<1x8x8xf32>
    "tpu.trace_stop"() : () -> ()
    %cst_15 = arith.constant dense<0xFF800000> : vector<1x8xf32>
    %16 = vector.multi_reduction <maximumf>, %15, %cst_15 [2] : vector<1x8x8xf32> to vector<1x8xf32>
    %17 = vector.shape_cast %16 : vector<1x8xf32> to vector<1x8x1xf32>
    %18 = vector.broadcast %17 : vector<1x8x1xf32> to vector<1x8x8xf32>
    %19 = arith.subf %15, %18 : vector<1x8x8xf32>
    %20 = math.exp %19 : vector<1x8x8xf32>
    %cst_16 = arith.constant dense<0.000000e+00> : vector<1x8xf32>
    %21 = vector.multi_reduction <add>, %20, %cst_16 [2] : vector<1x8x8xf32> to vector<1x8xf32>
    %22 = vector.shape_cast %21 : vector<1x8xf32> to vector<1x8x1xf32>
    %23 = tpu.reciprocal %22 {approx = true} : vector<1x8x1xf32> -> vector<1x8x1xf32>
    %24 = vector.broadcast %23 : vector<1x8x1xf32> to vector<1x8x8xf32>
    %25 = arith.mulf %20, %24 : vector<1x8x8xf32>
    "tpu.trace_start"() <{level = 10 : i32, message = "bqk,bkd->bqd"}> : () -> ()
    %cst_17 = arith.constant dense<0.000000e+00> : vector<1x8x8xf32>
    %26 = tpu.matmul %25, %14, %cst_17 {dimension_numbers = #tpu.dot_dimension_numbers<[2], [1], [1], [2], [0, 0, 0, 1, 1, 2], [0], [0]>} : vector<1x8x8xf32>, vector<1x8x8xf32>, vector<1x8x8xf32> -> vector<1x8x8xf32>
    "tpu.trace_stop"() : () -> ()
    %27 = vector.shape_cast %26 : vector<1x8x8xf32> to vector<8x8xf32>
    %c0_18 = arith.constant 0 : index
    %c0_19 = arith.constant 0 : index
    %c0_20 = arith.constant 0 : index
    %28 = vector.load %arg5[%c0_18, %c0_19, %c0_20] : memref<4x8x32xf32, #tpu.memory_space<vmem>>, vector<1x8x32xf32>
    %29 = vector.shape_cast %28 : vector<1x8x32xf32> to vector<8x32xf32>
    %cst_21 = arith.constant dense<0.000000e+00> : vector<8x32xf32>
    %30 = tpu.matmul %27, %29, %cst_21 {dimension_numbers = #tpu.dot_dimension_numbers<[1], [0], [0], [1], [0, 0, 1, 1], [], []>} : vector<8x8xf32>, vector<8x32xf32>, vector<8x32xf32> -> vector<8x32xf32>
    %31 = arith.addf %2, %30 : vector<8x32xf32>
    %c1 = arith.constant 1 : index
    %c0_22 = arith.constant 0 : index
    %c0_23 = arith.constant 0 : index
    %32 = vector.load %arg2[%c1, %c0_22, %c0_23] : memref<4x32x8xf32, #tpu.memory_space<vmem>>, vector<1x32x8xf32>
    %33 = vector.shape_cast %32 : vector<1x32x8xf32> to vector<32x8xf32>
    %cst_24 = arith.constant dense<0.000000e+00> : vector<8x8xf32>
    %34 = tpu.matmul %1, %33, %cst_24 {dimension_numbers = #tpu.dot_dimension_numbers<[1], [0], [0], [1], [0, 0, 1, 1], [], []>} : vector<8x32xf32>, vector<32x8xf32>, vector<8x8xf32> -> vector<8x8xf32>
    %c1_25 = arith.constant 1 : index
    %c0_26 = arith.constant 0 : index
    %c0_27 = arith.constant 0 : index
    %35 = vector.load %arg3[%c1_25, %c0_26, %c0_27] : memref<4x32x8xf32, #tpu.memory_space<vmem>>, vector<1x32x8xf32>
    %36 = vector.shape_cast %35 : vector<1x32x8xf32> to vector<32x8xf32>
    %cst_28 = arith.constant dense<0.000000e+00> : vector<8x8xf32>
    %37 = tpu.matmul %1, %36, %cst_28 {dimension_numbers = #tpu.dot_dimension_numbers<[1], [0], [0], [1], [0, 0, 1, 1], [], []>} : vector<8x32xf32>, vector<32x8xf32>, vector<8x8xf32> -> vector<8x8xf32>
    %c1_29 = arith.constant 1 : index
    %c0_30 = arith.constant 0 : index
    %c0_31 = arith.constant 0 : index
    %38 = vector.load %arg4[%c1_29, %c0_30, %c0_31] : memref<4x32x8xf32, #tpu.memory_space<vmem>>, vector<1x32x8xf32>
    %39 = vector.shape_cast %38 : vector<1x32x8xf32> to vector<32x8xf32>
    %cst_32 = arith.constant dense<0.000000e+00> : vector<8x8xf32>
    %40 = tpu.matmul %1, %39, %cst_32 {dimension_numbers = #tpu.dot_dimension_numbers<[1], [0], [0], [1], [0, 0, 1, 1], [], []>} : vector<8x32xf32>, vector<32x8xf32>, vector<8x8xf32> -> vector<8x8xf32>
    %41 = vector.shape_cast %34 : vector<8x8xf32> to vector<1x8x8xf32>
    %42 = vector.shape_cast %37 : vector<8x8xf32> to vector<1x8x8xf32>
    %43 = vector.shape_cast %40 : vector<8x8xf32> to vector<1x8x8xf32>
    "tpu.trace_start"() <{level = 10 : i32, message = "bqd,bkd->bqk"}> : () -> ()
    %cst_33 = arith.constant dense<0.000000e+00> : vector<1x8x8xf32>
    %44 = tpu.matmul %41, %42, %cst_33 {dimension_numbers = #tpu.dot_dimension_numbers<[2], [2], [1], [1], [0, 0, 0, 1, 1, 1], [0], [0]>} : vector<1x8x8xf32>, vector<1x8x8xf32>, vector<1x8x8xf32> -> vector<1x8x8xf32>
    "tpu.trace_stop"() : () -> ()
    %cst_34 = arith.constant dense<0xFF800000> : vector<1x8xf32>
    %45 = vector.multi_reduction <maximumf>, %44, %cst_34 [2] : vector<1x8x8xf32> to vector<1x8xf32>
    %46 = vector.shape_cast %45 : vector<1x8xf32> to vector<1x8x1xf32>
    %47 = vector.broadcast %46 : vector<1x8x1xf32> to vector<1x8x8xf32>
    %48 = arith.subf %44, %47 : vector<1x8x8xf32>
    %49 = math.exp %48 : vector<1x8x8xf32>
    %cst_35 = arith.constant dense<0.000000e+00> : vector<1x8xf32>
    %50 = vector.multi_reduction <add>, %49, %cst_35 [2] : vector<1x8x8xf32> to vector<1x8xf32>
    %51 = vector.shape_cast %50 : vector<1x8xf32> to vector<1x8x1xf32>
    %52 = tpu.reciprocal %51 {approx = true} : vector<1x8x1xf32> -> vector<1x8x1xf32>
    %53 = vector.broadcast %52 : vector<1x8x1xf32> to vector<1x8x8xf32>
    %54 = arith.mulf %49, %53 : vector<1x8x8xf32>
    "tpu.trace_start"() <{level = 10 : i32, message = "bqk,bkd->bqd"}> : () -> ()
    %cst_36 = arith.constant dense<0.000000e+00> : vector<1x8x8xf32>
    %55 = tpu.matmul %54, %43, %cst_36 {dimension_numbers = #tpu.dot_dimension_numbers<[2], [1], [1], [2], [0, 0, 0, 1, 1, 2], [0], [0]>} : vector<1x8x8xf32>, vector<1x8x8xf32>, vector<1x8x8xf32> -> vector<1x8x8xf32>
    "tpu.trace_stop"() : () -> ()
    %56 = vector.shape_cast %55 : vector<1x8x8xf32> to vector<8x8xf32>
    %c1_37 = arith.constant 1 : index
    %c0_38 = arith.constant 0 : index
    %c0_39 = arith.constant 0 : index
    %57 = vector.load %arg5[%c1_37, %c0_38, %c0_39] : memref<4x8x32xf32, #tpu.memory_space<vmem>>, vector<1x8x32xf32>
    %58 = vector.shape_cast %57 : vector<1x8x32xf32> to vector<8x32xf32>
    %cst_40 = arith.constant dense<0.000000e+00> : vector<8x32xf32>
    %59 = tpu.matmul %56, %58, %cst_40 {dimension_numbers = #tpu.dot_dimension_numbers<[1], [0], [0], [1], [0, 0, 1, 1], [], []>} : vector<8x8xf32>, vector<8x32xf32>, vector<8x32xf32> -> vector<8x32xf32>
    %60 = arith.addf %31, %59 : vector<8x32xf32>
    %c2 = arith.constant 2 : index
    %c0_41 = arith.constant 0 : index
    %c0_42 = arith.constant 0 : index
    %61 = vector.load %arg2[%c2, %c0_41, %c0_42] : memref<4x32x8xf32, #tpu.memory_space<vmem>>, vector<1x32x8xf32>
    %62 = vector.shape_cast %61 : vector<1x32x8xf32> to vector<32x8xf32>
    %cst_43 = arith.constant dense<0.000000e+00> : vector<8x8xf32>
    %63 = tpu.matmul %1, %62, %cst_43 {dimension_numbers = #tpu.dot_dimension_numbers<[1], [0], [0], [1], [0, 0, 1, 1], [], []>} : vector<8x32xf32>, vector<32x8xf32>, vector<8x8xf32> -> vector<8x8xf32>
    %c2_44 = arith.constant 2 : index
    %c0_45 = arith.constant 0 : index
    %c0_46 = arith.constant 0 : index
    %64 = vector.load %arg3[%c2_44, %c0_45, %c0_46] : memref<4x32x8xf32, #tpu.memory_space<vmem>>, vector<1x32x8xf32>
    %65 = vector.shape_cast %64 : vector<1x32x8xf32> to vector<32x8xf32>
    %cst_47 = arith.constant dense<0.000000e+00> : vector<8x8xf32>
    %66 = tpu.matmul %1, %65, %cst_47 {dimension_numbers = #tpu.dot_dimension_numbers<[1], [0], [0], [1], [0, 0, 1, 1], [], []>} : vector<8x32xf32>, vector<32x8xf32>, vector<8x8xf32> -> vector<8x8xf32>
    %c2_48 = arith.constant 2 : index
    %c0_49 = arith.constant 0 : index
    %c0_50 = arith.constant 0 : index
    %67 = vector.load %arg4[%c2_48, %c0_49, %c0_50] : memref<4x32x8xf32, #tpu.memory_space<vmem>>, vector<1x32x8xf32>
    %68 = vector.shape_cast %67 : vector<1x32x8xf32> to vector<32x8xf32>
    %cst_51 = arith.constant dense<0.000000e+00> : vector<8x8xf32>
    %69 = tpu.matmul %1, %68, %cst_51 {dimension_numbers = #tpu.dot_dimension_numbers<[1], [0], [0], [1], [0, 0, 1, 1], [], []>} : vector<8x32xf32>, vector<32x8xf32>, vector<8x8xf32> -> vector<8x8xf32>
    %70 = vector.shape_cast %63 : vector<8x8xf32> to vector<1x8x8xf32>
    %71 = vector.shape_cast %66 : vector<8x8xf32> to vector<1x8x8xf32>
    %72 = vector.shape_cast %69 : vector<8x8xf32> to vector<1x8x8xf32>
    "tpu.trace_start"() <{level = 10 : i32, message = "bqd,bkd->bqk"}> : () -> ()
    %cst_52 = arith.constant dense<0.000000e+00> : vector<1x8x8xf32>
    %73 = tpu.matmul %70, %71, %cst_52 {dimension_numbers = #tpu.dot_dimension_numbers<[2], [2], [1], [1], [0, 0, 0, 1, 1, 1], [0], [0]>} : vector<1x8x8xf32>, vector<1x8x8xf32>, vector<1x8x8xf32> -> vector<1x8x8xf32>
    "tpu.trace_stop"() : () -> ()
    %cst_53 = arith.constant dense<0xFF800000> : vector<1x8xf32>
    %74 = vector.multi_reduction <maximumf>, %73, %cst_53 [2] : vector<1x8x8xf32> to vector<1x8xf32>
    %75 = vector.shape_cast %74 : vector<1x8xf32> to vector<1x8x1xf32>
    %76 = vector.broadcast %75 : vector<1x8x1xf32> to vector<1x8x8xf32>
    %77 = arith.subf %73, %76 : vector<1x8x8xf32>
    %78 = math.exp %77 : vector<1x8x8xf32>
    %cst_54 = arith.constant dense<0.000000e+00> : vector<1x8xf32>
    %79 = vector.multi_reduction <add>, %78, %cst_54 [2] : vector<1x8x8xf32> to vector<1x8xf32>
    %80 = vector.shape_cast %79 : vector<1x8xf32> to vector<1x8x1xf32>
    %81 = tpu.reciprocal %80 {approx = true} : vector<1x8x1xf32> -> vector<1x8x1xf32>
    %82 = vector.broadcast %81 : vector<1x8x1xf32> to vector<1x8x8xf32>
    %83 = arith.mulf %78, %82 : vector<1x8x8xf32>
    "tpu.trace_start"() <{level = 10 : i32, message = "bqk,bkd->bqd"}> : () -> ()
    %cst_55 = arith.constant dense<0.000000e+00> : vector<1x8x8xf32>
    %84 = tpu.matmul %83, %72, %cst_55 {dimension_numbers = #tpu.dot_dimension_numbers<[2], [1], [1], [2], [0, 0, 0, 1, 1, 2], [0], [0]>} : vector<1x8x8xf32>, vector<1x8x8xf32>, vector<1x8x8xf32> -> vector<1x8x8xf32>
    "tpu.trace_stop"() : () -> ()
    %85 = vector.shape_cast %84 : vector<1x8x8xf32> to vector<8x8xf32>
    %c2_56 = arith.constant 2 : index
    %c0_57 = arith.constant 0 : index
    %c0_58 = arith.constant 0 : index
    %86 = vector.load %arg5[%c2_56, %c0_57, %c0_58] : memref<4x8x32xf32, #tpu.memory_space<vmem>>, vector<1x8x32xf32>
    %87 = vector.shape_cast %86 : vector<1x8x32xf32> to vector<8x32xf32>
    %cst_59 = arith.constant dense<0.000000e+00> : vector<8x32xf32>
    %88 = tpu.matmul %85, %87, %cst_59 {dimension_numbers = #tpu.dot_dimension_numbers<[1], [0], [0], [1], [0, 0, 1, 1], [], []>} : vector<8x8xf32>, vector<8x32xf32>, vector<8x32xf32> -> vector<8x32xf32>
    %89 = arith.addf %60, %88 : vector<8x32xf32>
    %c3 = arith.constant 3 : index
    %c0_60 = arith.constant 0 : index
    %c0_61 = arith.constant 0 : index
    %90 = vector.load %arg2[%c3, %c0_60, %c0_61] : memref<4x32x8xf32, #tpu.memory_space<vmem>>, vector<1x32x8xf32>
    %91 = vector.shape_cast %90 : vector<1x32x8xf32> to vector<32x8xf32>
    %cst_62 = arith.constant dense<0.000000e+00> : vector<8x8xf32>
    %92 = tpu.matmul %1, %91, %cst_62 {dimension_numbers = #tpu.dot_dimension_numbers<[1], [0], [0], [1], [0, 0, 1, 1], [], []>} : vector<8x32xf32>, vector<32x8xf32>, vector<8x8xf32> -> vector<8x8xf32>
    %c3_63 = arith.constant 3 : index
    %c0_64 = arith.constant 0 : index
    %c0_65 = arith.constant 0 : index
    %93 = vector.load %arg3[%c3_63, %c0_64, %c0_65] : memref<4x32x8xf32, #tpu.memory_space<vmem>>, vector<1x32x8xf32>
    %94 = vector.shape_cast %93 : vector<1x32x8xf32> to vector<32x8xf32>
    %cst_66 = arith.constant dense<0.000000e+00> : vector<8x8xf32>
    %95 = tpu.matmul %1, %94, %cst_66 {dimension_numbers = #tpu.dot_dimension_numbers<[1], [0], [0], [1], [0, 0, 1, 1], [], []>} : vector<8x32xf32>, vector<32x8xf32>, vector<8x8xf32> -> vector<8x8xf32>
    %c3_67 = arith.constant 3 : index
    %c0_68 = arith.constant 0 : index
    %c0_69 = arith.constant 0 : index
    %96 = vector.load %arg4[%c3_67, %c0_68, %c0_69] : memref<4x32x8xf32, #tpu.memory_space<vmem>>, vector<1x32x8xf32>
    %97 = vector.shape_cast %96 : vector<1x32x8xf32> to vector<32x8xf32>
    %cst_70 = arith.constant dense<0.000000e+00> : vector<8x8xf32>
    %98 = tpu.matmul %1, %97, %cst_70 {dimension_numbers = #tpu.dot_dimension_numbers<[1], [0], [0], [1], [0, 0, 1, 1], [], []>} : vector<8x32xf32>, vector<32x8xf32>, vector<8x8xf32> -> vector<8x8xf32>
    %99 = vector.shape_cast %92 : vector<8x8xf32> to vector<1x8x8xf32>
    %100 = vector.shape_cast %95 : vector<8x8xf32> to vector<1x8x8xf32>
    %101 = vector.shape_cast %98 : vector<8x8xf32> to vector<1x8x8xf32>
    "tpu.trace_start"() <{level = 10 : i32, message = "bqd,bkd->bqk"}> : () -> ()
    %cst_71 = arith.constant dense<0.000000e+00> : vector<1x8x8xf32>
    %102 = tpu.matmul %99, %100, %cst_71 {dimension_numbers = #tpu.dot_dimension_numbers<[2], [2], [1], [1], [0, 0, 0, 1, 1, 1], [0], [0]>} : vector<1x8x8xf32>, vector<1x8x8xf32>, vector<1x8x8xf32> -> vector<1x8x8xf32>
    "tpu.trace_stop"() : () -> ()
    %cst_72 = arith.constant dense<0xFF800000> : vector<1x8xf32>
    %103 = vector.multi_reduction <maximumf>, %102, %cst_72 [2] : vector<1x8x8xf32> to vector<1x8xf32>
    %104 = vector.shape_cast %103 : vector<1x8xf32> to vector<1x8x1xf32>
    %105 = vector.broadcast %104 : vector<1x8x1xf32> to vector<1x8x8xf32>
    %106 = arith.subf %102, %105 : vector<1x8x8xf32>
    %107 = math.exp %106 : vector<1x8x8xf32>
    %cst_73 = arith.constant dense<0.000000e+00> : vector<1x8xf32>
    %108 = vector.multi_reduction <add>, %107, %cst_73 [2] : vector<1x8x8xf32> to vector<1x8xf32>
    %109 = vector.shape_cast %108 : vector<1x8xf32> to vector<1x8x1xf32>
    %110 = tpu.reciprocal %109 {approx = true} : vector<1x8x1xf32> -> vector<1x8x1xf32>
    %111 = vector.broadcast %110 : vector<1x8x1xf32> to vector<1x8x8xf32>
    %112 = arith.mulf %107, %111 : vector<1x8x8xf32>
    "tpu.trace_start"() <{level = 10 : i32, message = "bqk,bkd->bqd"}> : () -> ()
    %cst_74 = arith.constant dense<0.000000e+00> : vector<1x8x8xf32>
    %113 = tpu.matmul %112, %101, %cst_74 {dimension_numbers = #tpu.dot_dimension_numbers<[2], [1], [1], [2], [0, 0, 0, 1, 1, 2], [0], [0]>} : vector<1x8x8xf32>, vector<1x8x8xf32>, vector<1x8x8xf32> -> vector<1x8x8xf32>
    "tpu.trace_stop"() : () -> ()
    %114 = vector.shape_cast %113 : vector<1x8x8xf32> to vector<8x8xf32>
    %c3_75 = arith.constant 3 : index
    %c0_76 = arith.constant 0 : index
    %c0_77 = arith.constant 0 : index
    %115 = vector.load %arg5[%c3_75, %c0_76, %c0_77] : memref<4x8x32xf32, #tpu.memory_space<vmem>>, vector<1x8x32xf32>
    %116 = vector.shape_cast %115 : vector<1x8x32xf32> to vector<8x32xf32>
    %cst_78 = arith.constant dense<0.000000e+00> : vector<8x32xf32>
    %117 = tpu.matmul %114, %116, %cst_78 {dimension_numbers = #tpu.dot_dimension_numbers<[1], [0], [0], [1], [0, 0, 1, 1], [], []>} : vector<8x8xf32>, vector<8x32xf32>, vector<8x32xf32> -> vector<8x32xf32>
    %118 = arith.addf %89, %117 : vector<8x32xf32>
    %119 = vector.shape_cast %118 : vector<8x32xf32> to vector<1x8x32xf32>
    %c0_79 = arith.constant 0 : index
    %c0_80 = arith.constant 0 : index
    %c0_81 = arith.constant 0 : index
    %120 = vector.load %arg6[%c0_79, %c0_80, %c0_81] : memref<1x8x32xf32, #tpu.memory_space<vmem>>, vector<1x8x32xf32>
    tpu.vector_store %arg6[%c0_79, %c0_80, %c0_81], %119 {strides = array<i32>} : memref<1x8x32xf32, #tpu.memory_space<vmem>>, vector<1x8x32xf32>,
    return
  }
  func.func @transform_0(%arg0: i32) -> (i32, i32, i32) {
    %c0_i32 = arith.constant 0 : i32
    %c0_i32_0 = arith.constant 0 : i32
    %c0_i32_1 = arith.constant 0 : i32
    return %arg0, %c0_i32, %c0_i32_0 : i32, i32, i32
  }
  func.func @transform_1(%arg0: i32) -> (i32, i32, i32) {
    %c0_i32 = arith.constant 0 : i32
    %c0_i32_0 = arith.constant 0 : i32
    %c0_i32_1 = arith.constant 0 : i32
    %c0_i32_2 = arith.constant 0 : i32
    return %c0_i32, %c0_i32_0, %c0_i32_1 : i32, i32, i32
  }
  func.func @transform_2(%arg0: i32) -> (i32, i32, i32) {
    %c0_i32 = arith.constant 0 : i32
    %c0_i32_0 = arith.constant 0 : i32
    %c0_i32_1 = arith.constant 0 : i32
    %c0_i32_2 = arith.constant 0 : i32
    return %c0_i32, %c0_i32_0, %c0_i32_1 : i32, i32, i32
  }
  func.func @transform_3(%arg0: i32) -> (i32, i32, i32) {
    %c0_i32 = arith.constant 0 : i32
    %c0_i32_0 = arith.constant 0 : i32
    %c0_i32_1 = arith.constant 0 : i32
    %c0_i32_2 = arith.constant 0 : i32
    return %c0_i32, %c0_i32_0, %c0_i32_1 : i32, i32, i32
  }
  func.func @transform_4(%arg0: i32) -> (i32, i32, i32) {
    %c0_i32 = arith.constant 0 : i32
    %c0_i32_0 = arith.constant 0 : i32
    %c0_i32_1 = arith.constant 0 : i32
    %c0_i32_2 = arith.constant 0 : i32
    return %c0_i32, %c0_i32_0, %c0_i32_1 : i32, i32, i32
  }
  func.func @transform_5(%arg0: i32) -> (i32, i32, i32) {
    %c0_i32 = arith.constant 0 : i32
    %c0_i32_0 = arith.constant 0 : i32
    %c0_i32_1 = arith.constant 0 : i32
    return %arg0, %c0_i32, %c0_i32_0 : i32, i32, i32
  }
}

</mosaic_0001>

<llo_original>
// kernel: tpu_custom_call.1
$region0: #{tpu_custom_call.1}
  #allocation0 [shape = 'u32[]', space=smem, size = 0x4, offset = 0x4, fixed_abs, tag = 'smem constant byte address 0x4 - core index']
  #allocation1 [shape = 'u32[72,128]{1,0:T(1,128)}', space=vmem, size = 0x9000, scoped, tag = 'internal scratch']
  %s0 = inlined_call_operand.vmem [shape: f32[2,8,32], index: 0, kind: input, shape index: {}]
  %s1 = inlined_call_operand.vmem [shape: f32[4,32,8], index: 1, kind: input, shape index: {}]
  %s2 = inlined_call_operand.vmem [shape: f32[4,32,8], index: 2, kind: input, shape index: {}]
  %s3 = inlined_call_operand.vmem [shape: f32[4,32,8], index: 3, kind: input, shape index: {}]
  %s4 = inlined_call_operand.vmem [shape: f32[4,8,32], index: 4, kind: input, shape index: {}]
  %s5 = inlined_call_operand.hbm [shape: f32[2,8,32], index: 5, kind: output, shape index: {}]
  %s6 = sld [smem:[#allocation0]]
  $region53: #{tpu_custom_call.1} parent=0
    _
  %s8 = ssub.s32 1, %s6
  %s9 = scalar_select 0, %s8, %s6
  $region1: #{tpu_custom_call.1} parent=0
    #allocation2 [shape = 'u8[8192]{0}', space=vmem, size = 0x2000, scoped, tag = 'output window, operand 0']
    #allocation3 [shape = 's32[2]{0}', space=sflag, size = 0x8, scoped, tag = 'scoped memory for tpu_custom_call.1']
    %10 = vsyncpa [#allocation3], 0
    %s11 = scalar_lea.sflag [#allocation3], 1
    %12 = vsyncpa %s11, 0
    loop: start=0, step=1, limit=4
    $region2: #{tpu_custom_call.1} parent=1 // loop_pre_header
      _
    $region3: #{tpu_custom_call.1} parent=1 // loop_header
      %s14 = sphi 0, %s18
      %p15 = scmp.ge.s32.totalorder %s14, 4
      %s24 = sphi 0, %s26
      %s27 = sphi 0, %s24
      %s28 = sphi 0, %s27
      %s44 = sphi 0, %s28
      %s48 = sphi 0, %s48
      %s50 = sphi 0, %s48
      %s51 = sphi 0, %s50
      %s65 = sphi 0, %s51
      %s69 = sphi 0, %s69
      %s71 = sphi 0, %s69
      %s72 = sphi 0, %s71
      %s86 = sphi 0, %s72
      %s90 = sphi 0, %s90
      %s92 = sphi 0, %s90
      %s93 = sphi 0, %s92
      %s107 = sphi 0, %s93
      %s111 = sphi 0, %s111
      %s113 = sphi 0, %s111
      %s114 = sphi 0, %s113
      %s128 = sphi 0, %s114
      %s134 = sphi 0, %s136
      %s137 = sphi 0, %s134
      %s138 = sphi 0, %s137
      %s154 = sphi 0, %s138
    $region4: #{tpu_custom_call.1} parent=1 // loop_header_branch
      %17 = sbr.rel (%p15) target = $region8
    $region5: #{tpu_custom_call.1} parent=1 // loop_body
      %s19 = ssub.s32 %s14, 1
      %s20 = ssub.s32 %s14, 2
      %s21 = sadd.s32 %s14, 1
      %s22 = ssub.s32 %s14, %s21
      %p23 = scmp.eq.s32.totalorder %s22, 0
      %s25 = sadd.s32 %s24, 1
      %s26 = scalar_select %p23, %s24, %s25
      %p29 = pneg %p23
      %p30 = scmp.eq.s32.totalorder %s14, 1
      %p31 = por %p29, %p30
      %p32 = scmp.ne.s32.totalorder %s24, %s27
      %p33 = scmp.eq.s32.totalorder %s14, 0
      %p34 = por %p32, %p33
      %p35 = scmp.ne.s32.totalorder %s24, %s27
      %p36 = scmp.eq.s32.totalorder %s19, 1
      %p37 = por %p35, %p36
      %p38 = scmp.ne.s32.totalorder %s27, %s28
      %p39 = scmp.eq.s32.totalorder %s19, 0
      %p40 = por %p38, %p39
      %p41 = scmp.ne.s32.totalorder %s27, %s28
      %p42 = scmp.eq.s32.totalorder %s20, 1
      %p43 = por %p41, %p42
      %p45 = scmp.ne.s32.totalorder %s28, %s44
      %p46 = scmp.eq.s32.totalorder %s20, 0
      %p47 = por %p45, %p46
      %s49 = sadd.s32 %s48, 1
      %p52 = scmp.eq.s32.totalorder %s14, 1
      %p53 = scmp.ne.s32.totalorder %s48, %s50
      %p54 = scmp.eq.s32.totalorder %s14, 0
      %p55 = por %p53, %p54
      %p56 = scmp.ne.s32.totalorder %s48, %s50
      %p57 = scmp.eq.s32.totalorder %s19, 1
      %p58 = por %p56, %p57
      %p59 = scmp.ne.s32.totalorder %s50, %s51
      %p60 = scmp.eq.s32.totalorder %s19, 0
      %p61 = por %p59, %p60
      %p62 = scmp.ne.s32.totalorder %s50, %s51
      %p63 = scmp.eq.s32.totalorder %s20, 1
      %p64 = por %p62, %p63
      %p66 = scmp.ne.s32.totalorder %s51, %s65
      %p67 = scmp.eq.s32.totalorder %s20, 0
      %p68 = por %p66, %p67
      %s70 = sadd.s32 %s69, 1
      %p73 = scmp.eq.s32.totalorder %s14, 1
      %p74 = scmp.ne.s32.totalorder %s69, %s71
      %p75 = scmp.eq.s32.totalorder %s14, 0
      %p76 = por %p74, %p75
      %p77 = scmp.ne.s32.totalorder %s69, %s71
      %p78 = scmp.eq.s32.totalorder %s19, 1
      %p79 = por %p77, %p78
      %p80 = scmp.ne.s32.totalorder %s71, %s72
      %p81 = scmp.eq.s32.totalorder %s19, 0
      %p82 = por %p80, %p81
      %p83 = scmp.ne.s32.totalorder %s71, %s72
      %p84 = scmp.eq.s32.totalorder %s20, 1
      %p85 = por %p83, %p84
      %p87 = scmp.ne.s32.totalorder %s72, %s86
      %p88 = scmp.eq.s32.totalorder %s20, 0
      %p89 = por %p87, %p88
      %s91 = sadd.s32 %s90, 1
      %p94 = scmp.eq.s32.totalorder %s14, 1
      %p95 = scmp.ne.s32.totalorder %s90, %s92
      %p96 = scmp.eq.s32.totalorder %s14, 0
      %p97 = por %p95, %p96
      %p98 = scmp.ne.s32.totalorder %s90, %s92
      %p99 = scmp.eq.s32.totalorder %s19, 1
      %p100 = por %p98, %p99
      %p101 = scmp.ne.s32.totalorder %s92, %s93
      %p102 = scmp.eq.s32.totalorder %s19, 0
      %p103 = por %p101, %p102
      %p104 = scmp.ne.s32.totalorder %s92, %s93
      %p105 = scmp.eq.s32.totalorder %s20, 1
      %p106 = por %p104, %p105
      %p108 = scmp.ne.s32.totalorder %s93, %s107
      %p109 = scmp.eq.s32.totalorder %s20, 0
      %p110 = por %p108, %p109
      %s112 = sadd.s32 %s111, 1
      %p115 = scmp.eq.s32.totalorder %s14, 1
      %p116 = scmp.ne.s32.totalorder %s111, %s113
      %p117 = scmp.eq.s32.totalorder %s14, 0
      %p118 = por %p116, %p117
      %p119 = scmp.ne.s32.totalorder %s111, %s113
      %p120 = scmp.eq.s32.totalorder %s19, 1
      %p121 = por %p119, %p120
      %p122 = scmp.ne.s32.totalorder %s113, %s114
      %p123 = scmp.eq.s32.totalorder %s19, 0
      %p124 = por %p122, %p123
      %p125 = scmp.ne.s32.totalorder %s113, %s114
      %p126 = scmp.eq.s32.totalorder %s20, 1
      %p127 = por %p125, %p126
      %p129 = scmp.ne.s32.totalorder %s114, %s128
      %p130 = scmp.eq.s32.totalorder %s20, 0
      %p131 = por %p129, %p130
      %s132 = ssub.s32 %s14, %s21
      %p133 = scmp.eq.s32.totalorder %s132, 0
      %s135 = sadd.s32 %s134, 1
      %s136 = scalar_select %p133, %s134, %s135
      %p139 = pneg %p133
      %p140 = scmp.eq.s32.totalorder %s14, 1
      %p141 = por %p139, %p140
      %p142 = scmp.ne.s32.totalorder %s134, %s137
      %p143 = scmp.eq.s32.totalorder %s14, 0
      %p144 = por %p142, %p143
      %p145 = scmp.ne.s32.totalorder %s134, %s137
      %p146 = scmp.eq.s32.totalorder %s19, 1
      %p147 = por %p145, %p146
      %p148 = scmp.ne.s32.totalorder %s137, %s138
      %p149 = scmp.eq.s32.totalorder %s19, 0
      %p150 = por %p148, %p149
      %p151 = scmp.ne.s32.totalorder %s137, %s138
      %p152 = scmp.eq.s32.totalorder %s20, 1
      %p153 = por %p151, %p152
      %p155 = scmp.ne.s32.totalorder %s138, %s154
      %p156 = scmp.eq.s32.totalorder %s20, 0
      %p157 = por %p155, %p156
      %p158 = scmp.le.s32.totalorder 1, %s14
      %p159 = scmp.lt.s32.totalorder %s14, 3
      %p160 = pnand %p158, %p159
      %p161 = pneg %p160
      // Predicated region
      $region9: #{tpu_custom_call.1} parent=5 // pred_check
        _
      $region10: #{tpu_custom_call.1} parent=5 // pred_check_branch
        %163 = sbr.rel (%p160) target = $region12
      $region11: #{tpu_custom_call.1} parent=5 // pred_region
        %s164 = ssub.s32 %s14, 1
        // Predicated region
        $region13: #{tpu_custom_call.1} parent=11 // pred_check
          %p165 = pneg %p61
        $region14: #{tpu_custom_call.1} parent=11 // pred_check_branch
          %167 = sbr.rel (%p165) target = $region16
        $region15: #{tpu_custom_call.1} parent=11 // pred_region
          _
        $region16: #{tpu_custom_call.1} parent=11 // pred_fallthru
          _
        // Predicated region
        $region17: #{tpu_custom_call.1} parent=11 // pred_check
          %p168 = pneg %p82
        $region18: #{tpu_custom_call.1} parent=11 // pred_check_branch
          %170 = sbr.rel (%p168) target = $region20
        $region19: #{tpu_custom_call.1} parent=11 // pred_region
          _
        $region20: #{tpu_custom_call.1} parent=11 // pred_fallthru
          _
        // Predicated region
        $region21: #{tpu_custom_call.1} parent=11 // pred_check
          %p171 = pneg %p103
        $region22: #{tpu_custom_call.1} parent=11 // pred_check_branch
          %173 = sbr.rel (%p171) target = $region24
        $region23: #{tpu_custom_call.1} parent=11 // pred_region
          _
        $region24: #{tpu_custom_call.1} parent=11 // pred_fallthru
          _
        // Predicated region
        $region25: #{tpu_custom_call.1} parent=11 // pred_check
          %p174 = pneg %p124
        $region26: #{tpu_custom_call.1} parent=11 // pred_check_branch
          %176 = sbr.rel (%p174) target = $region28
        $region27: #{tpu_custom_call.1} parent=11 // pred_region
          _
        $region28: #{tpu_custom_call.1} parent=11 // pred_fallthru
          _
      $region12: #{tpu_custom_call.1} parent=5 // pred_fallthru
        _
      %p177 = scmp.lt.s32.totalorder %s14, 2
      // Predicated region
      $region29: #{tpu_custom_call.1} parent=5 // pred_check
        %p178 = pneg %p177
      $region30: #{tpu_custom_call.1} parent=5 // pred_check_branch
        %180 = sbr.rel (%p178) target = $region32
      $region31: #{tpu_custom_call.1} parent=5 // pred_region
        // Predicated region
        $region33: #{tpu_custom_call.1} parent=31 // pred_check
          %p181 = pneg %p34
        $region34: #{tpu_custom_call.1} parent=31 // pred_check_branch
          %183 = sbr.rel (%p181) target = $region36
        $region35: #{tpu_custom_call.1} parent=31 // pred_region
          %p184 = scmp.lt.s32.totalorder %s14, 1
          %s185 = scalar_select %p184, %s14, 1
          %s186 = smul.addr %s185, 8
          %s187 = scalar_lea.vmem %s0, %s186
        $region36: #{tpu_custom_call.1} parent=31 // pred_fallthru
          _
      $region32: #{tpu_custom_call.1} parent=5 // pred_fallthru
        _
      %p188 = scmp.le.s32.totalorder 1, %s14
      %p189 = scmp.lt.s32.totalorder %s14, 3
      %p190 = pnand %p188, %p189
      %p191 = pneg %p190
      // Predicated region
      $region37: #{tpu_custom_call.1} parent=5 // pred_check
        _
      $region38: #{tpu_custom_call.1} parent=5 // pred_check_branch
        %193 = sbr.rel (%p190) target = $region40
      $region39: #{tpu_custom_call.1} parent=5 // pred_region
        %s194 = ssub.s32 %s14, 1
        %p195 = scmp.lt.s32.totalorder %s19, 1
        %s196 = scalar_select %p195, %s19, 1
        %s197 = smul.addr %s196, 8
        %s198 = scalar_lea.vmem %s0, %s197
        %p199 = pneg %p40
        %p200 = pneg %p37
        %p201 = pneg %p61
        %p202 = pneg %p58
        %p203 = pneg %p82
        %p204 = pneg %p79
        %p205 = pneg %p103
        %p206 = pneg %p100
        %p207 = pneg %p124
        %p208 = pneg %p121
        %p209 = pneg %p150
        %p210 = pneg %p147
        %s211 = sand.u32 %s137, 1
        %s212 = scalar_lea.sflag [#allocation3], %s211
        %s213 = sand.u32 %s137, 1
        %s214 = smul.addr %s213, 8
        %s215 = scalar_lea.vmem [#allocation2], %s214
        %p216 = scmp.lt.s32.totalorder %s19, 1
        %s217 = scalar_select %p216, %s19, 1
        %s218 = smul.addr %s217, 8
        %s219 = scalar_lea.vmem %s0, %s218
        %v220 = vld [vmem:[%s219] sm:$0xff]
        %v221 = vld [vmem:[%s1] sm:$0xff]
        %v222 = vld [vmem:[%s1 + $0x8] sm:$0xff]
        %v223 = vld [vmem:[%s1 + $0x10] sm:$0xff]
        %v224 = vld [vmem:[%s1 + $0x18] sm:$0xff]
        %vm225 = vcmask 261120
        %v227 = vsel %vm225, %v220, 0
        %229 = vmatpush.msra.mxu0 0.0
        %230 = vmatpush.msra.mxu0 0.0
        %231 = vmatpush.msra.mxu0 0.0
        %232 = vmatpush.msra.mxu0 0.0
        %233 = vmatpush.msra.mxu0 0.0
        %234 = vmatpush.msra.mxu0 0.0
        %235 = vmatpush.msra.mxu0 0.0
        %236 = vmatpush.msra.mxu0 0.0
        %237 = vmatpush.msra.mxu0 0.0
        %238 = vmatpush.msra.mxu0 0.0
        %239 = vmatpush.msra.mxu0 0.0
        %240 = vmatpush.msra.mxu0 0.0
        %241 = vmatpush.msra.mxu0 %v224
        %242 = vmatpush.msra.mxu0 %v223
        %243 = vmatpush.msra.mxu0 %v222
        %244 = vmatpush.msra.mxu0 %v221
        %245 = vmatmul.f32.gmra.mxu0 %v227
        %v246 = vpop.f32.mrf.mxu0
        %v247 = vadd.f32 0.0, %v246
        %248 = vdwg.mxu0
        %v249 = vld [vmem:[%s2] sm:$0xff]
        %v250 = vld [vmem:[%s2 + $0x8] sm:$0xff]
        %v251 = vld [vmem:[%s2 + $0x10] sm:$0xff]
        %v252 = vld [vmem:[%s2 + $0x18] sm:$0xff]
        %253 = vmatpush.msra.mxu0 0.0
        %254 = vmatpush.msra.mxu0 0.0
        %255 = vmatpush.msra.mxu0 0.0
        %256 = vmatpush.msra.mxu0 0.0
        %257 = vmatpush.msra.mxu0 0.0
        %258 = vmatpush.msra.mxu0 0.0
        %259 = vmatpush.msra.mxu0 0.0
        %260 = vmatpush.msra.mxu0 0.0
        %261 = vmatpush.msra.mxu0 0.0
        %262 = vmatpush.msra.mxu0 0.0
        %263 = vmatpush.msra.mxu0 0.0
        %264 = vmatpush.msra.mxu0 0.0
        %265 = vmatpush.msra.mxu0 %v252
        %266 = vmatpush.msra.mxu0 %v251
        %267 = vmatpush.msra.mxu0 %v250
        %268 = vmatpush.msra.mxu0 %v249
        %269 = vmatmul.f32.gmra.mxu0 %v227
        %v270 = vpop.f32.mrf.mxu0
        %v271 = vadd.f32 0.0, %v270
        %272 = vdwg.mxu0
        %v273 = vld [vmem:[%s3] sm:$0xff]
        %v274 = vld [vmem:[%s3 + $0x8] sm:$0xff]
        %v275 = vld [vmem:[%s3 + $0x10] sm:$0xff]
        %v276 = vld [vmem:[%s3 + $0x18] sm:$0xff]
        %277 = vmatpush.msra.mxu0 0.0
        %278 = vmatpush.msra.mxu0 0.0
        %279 = vmatpush.msra.mxu0 0.0
        %280 = vmatpush.msra.mxu0 0.0
        %281 = vmatpush.msra.mxu0 0.0
        %282 = vmatpush.msra.mxu0 0.0
        %283 = vmatpush.msra.mxu0 0.0
        %284 = vmatpush.msra.mxu0 0.0
        %285 = vmatpush.msra.mxu0 0.0
        %286 = vmatpush.msra.mxu0 0.0
        %287 = vmatpush.msra.mxu0 0.0
        %288 = vmatpush.msra.mxu0 0.0
        %289 = vmatpush.msra.mxu0 %v276
        %290 = vmatpush.msra.mxu0 %v275
        %291 = vmatpush.msra.mxu0 %v274
        %292 = vmatpush.msra.mxu0 %v273
        %293 = vmatmul.f32.gmra.mxu0 %v227
        %v294 = vpop.f32.mrf.mxu0
        %v295 = vadd.f32 0.0, %v294
        %296 = vdwg.mxu0
        %vm297 = vcmask 64512
        %v299 = vsel %vm297, %v247, 0
        %v302 = vsel %vm297, %v271, 0
        %304 = vmatpush.xpose.msra.mxu0 0.0
        %305 = vmatpush.xpose.msra.mxu0 0.0
        %306 = vmatpush.xpose.msra.mxu0 0.0
        %307 = vmatpush.xpose.msra.mxu0 0.0
        %308 = vmatpush.xpose.msra.mxu0 0.0
        %309 = vmatpush.xpose.msra.mxu0 0.0
        %310 = vmatpush.xpose.msra.mxu0 0.0
        %311 = vmatpush.xpose.msra.mxu0 0.0
        %312 = vmatpush.xpose.msra.mxu0 0.0
        %313 = vmatpush.xpose.msra.mxu0 0.0
        %314 = vmatpush.xpose.msra.mxu0 0.0
        %315 = vmatpush.xpose.msra.mxu0 0.0
        %316 = vmatpush.xpose.msra.mxu0 0.0
        %317 = vmatpush.xpose.msra.mxu0 0.0
        %318 = vmatpush.xpose.msra.mxu0 0.0
        %319 = vmatpush.xpose.msra.mxu0 %v302
        %320 = vmatmul.f32.gmra.mxu0 %v299
        %v321 = vpop.f32.mrf.mxu0
        %v322 = vadd.f32 0.0, %v321
        %323 = vdwg.mxu0
        %v324 = vsel %vm297, %v322, -inf
        %325 = vmax.xlane.f32.xlu0 %v324
        %v326 = vpop.xlane.xlu0 %325
        %v327 = vsub.f32 %v322, %v326
        %v328 = vmul.f32 %v327, 1.442695
        %v329 = vpow.pop %v328
        %v330 = vsel %vm297, %v329, 0.0
        %331 = vadd.xlane.f32.xlu0 %v330
        %v332 = vpop.xlane.xlu0 %331
        %v333 = vrcp.pop %v332
        %v334 = vmul.f32 %v329, %v333
        %v336 = vsel %vm297, %v334, 0
        %338 = vmatpush.msra.mxu0 0.0
        %339 = vmatpush.msra.mxu0 0.0
        %340 = vmatpush.msra.mxu0 0.0
        %341 = vmatpush.msra.mxu0 0.0
        %342 = vmatpush.msra.mxu0 0.0
        %343 = vmatpush.msra.mxu0 0.0
        %344 = vmatpush.msra.mxu0 0.0
        %345 = vmatpush.msra.mxu0 0.0
        %346 = vmatpush.msra.mxu0 0.0
        %347 = vmatpush.msra.mxu0 0.0
        %348 = vmatpush.msra.mxu0 0.0
        %349 = vmatpush.msra.mxu0 0.0
        %350 = vmatpush.msra.mxu0 0.0
        %351 = vmatpush.msra.mxu0 0.0
        %352 = vmatpush.msra.mxu0 0.0
        %353 = vmatpush.msra.mxu0 %v295
        %354 = vmatmul.f32.gmra.mxu0 %v336
        %v355 = vpop.f32.mrf.mxu0
        %v356 = vadd.f32 0.0, %v355
        %357 = vdwg.mxu0
        %v358 = vld [vmem:[%s4] sm:$0xff]
        %s359 = scalar_lea.vmem %s1, 32
        %v360 = vld [vmem:[%s359] sm:$0xff]
        %v361 = vld [vmem:[%s359 + $0x8] sm:$0xff]
        %v362 = vld [vmem:[%s359 + $0x10] sm:$0xff]
        %v363 = vld [vmem:[%s359 + $0x18] sm:$0xff]
        %364 = vmatpush.msra.mxu0 0.0
        %365 = vmatpush.msra.mxu0 0.0
        %366 = vmatpush.msra.mxu0 0.0
        %367 = vmatpush.msra.mxu0 0.0
        %368 = vmatpush.msra.mxu0 0.0
        %369 = vmatpush.msra.mxu0 0.0
        %370 = vmatpush.msra.mxu0 0.0
        %371 = vmatpush.msra.mxu0 0.0
        %372 = vmatpush.msra.mxu0 0.0
        %373 = vmatpush.msra.mxu0 0.0
        %374 = vmatpush.msra.mxu0 0.0
        %375 = vmatpush.msra.mxu0 0.0
        %376 = vmatpush.msra.mxu0 %v363
        %377 = vmatpush.msra.mxu0 %v362
        %378 = vmatpush.msra.mxu0 %v361
        %379 = vmatpush.msra.mxu0 %v360
        %380 = vmatmul.f32.gmra.mxu0 %v227
        %v381 = vpop.f32.mrf.mxu0
        %v382 = vadd.f32 0.0, %v381
        %383 = vdwg.mxu0
        %s384 = scalar_lea.vmem %s2, 32
        %v385 = vld [vmem:[%s384] sm:$0xff]
        %v386 = vld [vmem:[%s384 + $0x8] sm:$0xff]
        %v387 = vld [vmem:[%s384 + $0x10] sm:$0xff]
        %v388 = vld [vmem:[%s384 + $0x18] sm:$0xff]
        %389 = vmatpush.msra.mxu0 0.0
        %390 = vmatpush.msra.mxu0 0.0
        %391 = vmatpush.msra.mxu0 0.0
        %392 = vmatpush.msra.mxu0 0.0
        %393 = vmatpush.msra.mxu0 0.0
        %394 = vmatpush.msra.mxu0 0.0
        %395 = vmatpush.msra.mxu0 0.0
        %396 = vmatpush.msra.mxu0 0.0
        %397 = vmatpush.msra.mxu0 0.0
        %398 = vmatpush.msra.mxu0 0.0
        %399 = vmatpush.msra.mxu0 0.0
        %400 = vmatpush.msra.mxu0 0.0
        %401 = vmatpush.msra.mxu0 %v388
        %402 = vmatpush.msra.mxu0 %v387
        %403 = vmatpush.msra.mxu0 %v386
        %404 = vmatpush.msra.mxu0 %v385
        %405 = vmatmul.f32.gmra.mxu0 %v227
        %v406 = vpop.f32.mrf.mxu0
        %v407 = vadd.f32 0.0, %v406
        %408 = vdwg.mxu0
        %s409 = scalar_lea.vmem %s3, 32
        %v410 = vld [vmem:[%s409] sm:$0xff]
        %v411 = vld [vmem:[%s409 + $0x8] sm:$0xff]
        %v412 = vld [vmem:[%s409 + $0x10] sm:$0xff]
        %v413 = vld [vmem:[%s409 + $0x18] sm:$0xff]
        %414 = vmatpush.msra.mxu0 0.0
        %415 = vmatpush.msra.mxu0 0.0
        %416 = vmatpush.msra.mxu0 0.0
        %417 = vmatpush.msra.mxu0 0.0
        %418 = vmatpush.msra.mxu0 0.0
        %419 = vmatpush.msra.mxu0 0.0
        %420 = vmatpush.msra.mxu0 0.0
        %421 = vmatpush.msra.mxu0 0.0
        %422 = vmatpush.msra.mxu0 0.0
        %423 = vmatpush.msra.mxu0 0.0
        %424 = vmatpush.msra.mxu0 0.0
        %425 = vmatpush.msra.mxu0 0.0
        %426 = vmatpush.msra.mxu0 %v413
        %427 = vmatpush.msra.mxu0 %v412
        %428 = vmatpush.msra.mxu0 %v411
        %429 = vmatpush.msra.mxu0 %v410
        %430 = vmatmul.f32.gmra.mxu0 %v227
        %v431 = vpop.f32.mrf.mxu0
        %v432 = vadd.f32 0.0, %v431
        %433 = vdwg.mxu0
        %v435 = vsel %vm297, %v382, 0
        %v438 = vsel %vm297, %v407, 0
        %440 = vmatpush.xpose.msra.mxu0 0.0
        %441 = vmatpush.xpose.msra.mxu0 0.0
        %442 = vmatpush.xpose.msra.mxu0 0.0
        %443 = vmatpush.xpose.msra.mxu0 0.0
        %444 = vmatpush.xpose.msra.mxu0 0.0
        %445 = vmatpush.xpose.msra.mxu0 0.0
        %446 = vmatpush.xpose.msra.mxu0 0.0
        %447 = vmatpush.xpose.msra.mxu0 0.0
        %448 = vmatpush.xpose.msra.mxu0 0.0
        %449 = vmatpush.xpose.msra.mxu0 0.0
        %450 = vmatpush.xpose.msra.mxu0 0.0
        %451 = vmatpush.xpose.msra.mxu0 0.0
        %452 = vmatpush.xpose.msra.mxu0 0.0
        %453 = vmatpush.xpose.msra.mxu0 0.0
        %454 = vmatpush.xpose.msra.mxu0 0.0
        %455 = vmatpush.xpose.msra.mxu0 %v438
        %456 = vmatmul.f32.gmra.mxu0 %v435
        %v457 = vpop.f32.mrf.mxu0
        %v458 = vadd.f32 0.0, %v457
        %459 = vdwg.mxu0
        %v460 = vsel %vm297, %v458, -inf
        %461 = vmax.xlane.f32.xlu0 %v460
        %v462 = vpop.xlane.xlu0 %461
        %v463 = vsub.f32 %v458, %v462
        %v464 = vmul.f32 %v463, 1.442695
        %v465 = vpow.pop %v464
        %v466 = vsel %vm297, %v465, 0.0
        %467 = vadd.xlane.f32.xlu0 %v466
        %v468 = vpop.xlane.xlu0 %467
        %v469 = vrcp.pop %v468
        %v470 = vmul.f32 %v465, %v469
        %v472 = vsel %vm297, %v470, 0
        %474 = vmatpush.msra.mxu0 0.0
        %475 = vmatpush.msra.mxu0 0.0
        %476 = vmatpush.msra.mxu0 0.0
        %477 = vmatpush.msra.mxu0 0.0
        %478 = vmatpush.msra.mxu0 0.0
        %479 = vmatpush.msra.mxu0 0.0
        %480 = vmatpush.msra.mxu0 0.0
        %481 = vmatpush.msra.mxu0 0.0
        %482 = vmatpush.msra.mxu0 0.0
        %483 = vmatpush.msra.mxu0 0.0
        %484 = vmatpush.msra.mxu0 0.0
        %485 = vmatpush.msra.mxu0 0.0
        %486 = vmatpush.msra.mxu0 0.0
        %487 = vmatpush.msra.mxu0 0.0
        %488 = vmatpush.msra.mxu0 0.0
        %489 = vmatpush.msra.mxu0 %v432
        %490 = vmatmul.f32.gmra.mxu0 %v472
        %v491 = vpop.f32.mrf.mxu0
        %v492 = vadd.f32 0.0, %v491
        %493 = vdwg.mxu0
        %s494 = scalar_lea.vmem %s4, 8
        %v495 = vld [vmem:[%s494] sm:$0xff]
        %v497 = vsel %vm297, %v492, 0
        %499 = vmatpush.msra.mxu0 0.0
        %500 = vmatpush.msra.mxu0 0.0
        %501 = vmatpush.msra.mxu0 0.0
        %502 = vmatpush.msra.mxu0 0.0
        %503 = vmatpush.msra.mxu0 0.0
        %504 = vmatpush.msra.mxu0 0.0
        %505 = vmatpush.msra.mxu0 0.0
        %506 = vmatpush.msra.mxu0 0.0
        %507 = vmatpush.msra.mxu0 0.0
        %508 = vmatpush.msra.mxu0 0.0
        %509 = vmatpush.msra.mxu0 0.0
        %510 = vmatpush.msra.mxu0 0.0
        %511 = vmatpush.msra.mxu0 0.0
        %512 = vmatpush.msra.mxu0 0.0
        %513 = vmatpush.msra.mxu0 0.0
        %514 = vmatpush.msra.mxu0 %v495
        %515 = vmatmul.f32.gmra.mxu0 %v497
        %v516 = vpop.f32.mrf.mxu0
        %v517 = vadd.f32 0.0, %v516
        %518 = vdwg.mxu0
        %v520 = vsel %vm297, %v356, 0
        %522 = vmatpush.msra.mxu0 0.0
        %523 = vmatpush.msra.mxu0 0.0
        %524 = vmatpush.msra.mxu0 0.0
        %525 = vmatpush.msra.mxu0 0.0
        %526 = vmatpush.msra.mxu0 0.0
        %527 = vmatpush.msra.mxu0 0.0
        %528 = vmatpush.msra.mxu0 0.0
        %529 = vmatpush.msra.mxu0 0.0
        %530 = vmatpush.msra.mxu0 0.0
        %531 = vmatpush.msra.mxu0 0.0
        %532 = vmatpush.msra.mxu0 0.0
        %533 = vmatpush.msra.mxu0 0.0
        %534 = vmatpush.msra.mxu0 0.0
        %535 = vmatpush.msra.mxu0 0.0
        %536 = vmatpush.msra.mxu0 0.0
        %537 = vmatpush.msra.mxu0 %v358
        %538 = vmatmul.f32.gmra.mxu0 %v520
        %v539 = vpop.f32.mrf.mxu0
        %v540 = vadd.f32 %v517, %v539
        %541 = vdwg.mxu0
        %s542 = scalar_lea.vmem %s1, 64
        %v543 = vld [vmem:[%s542] sm:$0xff]
        %v544 = vld [vmem:[%s542 + $0x8] sm:$0xff]
        %v545 = vld [vmem:[%s542 + $0x10] sm:$0xff]
        %v546 = vld [vmem:[%s542 + $0x18] sm:$0xff]
        %547 = vmatpush.msra.mxu0 0.0
        %548 = vmatpush.msra.mxu0 0.0
        %549 = vmatpush.msra.mxu0 0.0
        %550 = vmatpush.msra.mxu0 0.0
        %551 = vmatpush.msra.mxu0 0.0
        %552 = vmatpush.msra.mxu0 0.0
        %553 = vmatpush.msra.mxu0 0.0
        %554 = vmatpush.msra.mxu0 0.0
        %555 = vmatpush.msra.mxu0 0.0
        %556 = vmatpush.msra.mxu0 0.0
        %557 = vmatpush.msra.mxu0 0.0
        %558 = vmatpush.msra.mxu0 0.0
        %559 = vmatpush.msra.mxu0 %v546
        %560 = vmatpush.msra.mxu0 %v545
        %561 = vmatpush.msra.mxu0 %v544
        %562 = vmatpush.msra.mxu0 %v543
        %563 = vmatmul.f32.gmra.mxu0 %v227
        %v564 = vpop.f32.mrf.mxu0
        %v565 = vadd.f32 0.0, %v564
        %566 = vdwg.mxu0
        %s567 = scalar_lea.vmem %s2, 64
        %v568 = vld [vmem:[%s567] sm:$0xff]
        %v569 = vld [vmem:[%s567 + $0x8] sm:$0xff]
        %v570 = vld [vmem:[%s567 + $0x10] sm:$0xff]
        %v571 = vld [vmem:[%s567 + $0x18] sm:$0xff]
        %572 = vmatpush.msra.mxu0 0.0
        %573 = vmatpush.msra.mxu0 0.0
        %574 = vmatpush.msra.mxu0 0.0
        %575 = vmatpush.msra.mxu0 0.0
        %576 = vmatpush.msra.mxu0 0.0
        %577 = vmatpush.msra.mxu0 0.0
        %578 = vmatpush.msra.mxu0 0.0
        %579 = vmatpush.msra.mxu0 0.0
        %580 = vmatpush.msra.mxu0 0.0
        %581 = vmatpush.msra.mxu0 0.0
        %582 = vmatpush.msra.mxu0 0.0
        %583 = vmatpush.msra.mxu0 0.0
        %584 = vmatpush.msra.mxu0 %v571
        %585 = vmatpush.msra.mxu0 %v570
        %586 = vmatpush.msra.mxu0 %v569
        %587 = vmatpush.msra.mxu0 %v568
        %588 = vmatmul.f32.gmra.mxu0 %v227
        %v589 = vpop.f32.mrf.mxu0
        %v590 = vadd.f32 0.0, %v589
        %591 = vdwg.mxu0
        %s592 = scalar_lea.vmem %s3, 64
        %v593 = vld [vmem:[%s592] sm:$0xff]
        %v594 = vld [vmem:[%s592 + $0x8] sm:$0xff]
        %v595 = vld [vmem:[%s592 + $0x10] sm:$0xff]
        %v596 = vld [vmem:[%s592 + $0x18] sm:$0xff]
        %597 = vmatpush.msra.mxu0 0.0
        %598 = vmatpush.msra.mxu0 0.0
        %599 = vmatpush.msra.mxu0 0.0
        %600 = vmatpush.msra.mxu0 0.0
        %601 = vmatpush.msra.mxu0 0.0
        %602 = vmatpush.msra.mxu0 0.0
        %603 = vmatpush.msra.mxu0 0.0
        %604 = vmatpush.msra.mxu0 0.0
        %605 = vmatpush.msra.mxu0 0.0
        %606 = vmatpush.msra.mxu0 0.0
        %607 = vmatpush.msra.mxu0 0.0
        %608 = vmatpush.msra.mxu0 0.0
        %609 = vmatpush.msra.mxu0 %v596
        %610 = vmatpush.msra.mxu0 %v595
        %611 = vmatpush.msra.mxu0 %v594
        %612 = vmatpush.msra.mxu0 %v593
        %613 = vmatmul.f32.gmra.mxu0 %v227
        %v614 = vpop.f32.mrf.mxu0
        %v615 = vadd.f32 0.0, %v614
        %616 = vdwg.mxu0
        %v618 = vsel %vm297, %v565, 0
        %v621 = vsel %vm297, %v590, 0
        %623 = vmatpush.xpose.msra.mxu0 0.0
        %624 = vmatpush.xpose.msra.mxu0 0.0
        %625 = vmatpush.xpose.msra.mxu0 0.0
        %626 = vmatpush.xpose.msra.mxu0 0.0
        %627 = vmatpush.xpose.msra.mxu0 0.0
        %628 = vmatpush.xpose.msra.mxu0 0.0
        %629 = vmatpush.xpose.msra.mxu0 0.0
        %630 = vmatpush.xpose.msra.mxu0 0.0
        %631 = vmatpush.xpose.msra.mxu0 0.0
        %632 = vmatpush.xpose.msra.mxu0 0.0
        %633 = vmatpush.xpose.msra.mxu0 0.0
        %634 = vmatpush.xpose.msra.mxu0 0.0
        %635 = vmatpush.xpose.msra.mxu0 0.0
        %636 = vmatpush.xpose.msra.mxu0 0.0
        %637 = vmatpush.xpose.msra.mxu0 0.0
        %638 = vmatpush.xpose.msra.mxu0 %v621
        %639 = vmatmul.f32.gmra.mxu0 %v618
        %v640 = vpop.f32.mrf.mxu0
        %v641 = vadd.f32 0.0, %v640
        %642 = vdwg.mxu0
        %v643 = vsel %vm297, %v641, -inf
        %644 = vmax.xlane.f32.xlu0 %v643
        %v645 = vpop.xlane.xlu0 %644
        %v646 = vsub.f32 %v641, %v645
        %v647 = vmul.f32 %v646, 1.442695
        %v648 = vpow.pop %v647
        %v649 = vsel %vm297, %v648, 0.0
        %650 = vadd.xlane.f32.xlu0 %v649
        %v651 = vpop.xlane.xlu0 %650
        %v652 = vrcp.pop %v651
        %v653 = vmul.f32 %v648, %v652
        %v655 = vsel %vm297, %v653, 0
        %657 = vmatpush.msra.mxu0 0.0
        %658 = vmatpush.msra.mxu0 0.0
        %659 = vmatpush.msra.mxu0 0.0
        %660 = vmatpush.msra.mxu0 0.0
        %661 = vmatpush.msra.mxu0 0.0
        %662 = vmatpush.msra.mxu0 0.0
        %663 = vmatpush.msra.mxu0 0.0
        %664 = vmatpush.msra.mxu0 0.0
        %665 = vmatpush.msra.mxu0 0.0
        %666 = vmatpush.msra.mxu0 0.0
        %667 = vmatpush.msra.mxu0 0.0
        %668 = vmatpush.msra.mxu0 0.0
        %669 = vmatpush.msra.mxu0 0.0
        %670 = vmatpush.msra.mxu0 0.0
        %671 = vmatpush.msra.mxu0 0.0
        %672 = vmatpush.msra.mxu0 %v615
        %673 = vmatmul.f32.gmra.mxu0 %v655
        %v674 = vpop.f32.mrf.mxu0
        %v675 = vadd.f32 0.0, %v674
        %676 = vdwg.mxu0
        %s677 = scalar_lea.vmem %s4, 16
        %v678 = vld [vmem:[%s677] sm:$0xff]
        %v680 = vsel %vm297, %v675, 0
        %682 = vmatpush.msra.mxu0 0.0
        %683 = vmatpush.msra.mxu0 0.0
        %684 = vmatpush.msra.mxu0 0.0
        %685 = vmatpush.msra.mxu0 0.0
        %686 = vmatpush.msra.mxu0 0.0
        %687 = vmatpush.msra.mxu0 0.0
        %688 = vmatpush.msra.mxu0 0.0
        %689 = vmatpush.msra.mxu0 0.0
        %690 = vmatpush.msra.mxu0 0.0
        %691 = vmatpush.msra.mxu0 0.0
        %692 = vmatpush.msra.mxu0 0.0
        %693 = vmatpush.msra.mxu0 0.0
        %694 = vmatpush.msra.mxu0 0.0
        %695 = vmatpush.msra.mxu0 0.0
        %696 = vmatpush.msra.mxu0 0.0
        %697 = vmatpush.msra.mxu0 %v678
        %698 = vmatmul.f32.gmra.mxu0 %v680
        %v699 = vpop.f32.mrf.mxu0
        %v700 = vadd.f32 0.0, %v699
        %701 = vdwg.mxu0
        %v702 = vadd.f32 %v540, %v700
        %s703 = scalar_lea.vmem %s1, 96
        %v704 = vld [vmem:[%s703] sm:$0xff]
        %v705 = vld [vmem:[%s703 + $0x8] sm:$0xff]
        %v706 = vld [vmem:[%s703 + $0x10] sm:$0xff]
        %v707 = vld [vmem:[%s703 + $0x18] sm:$0xff]
        %708 = vmatpush.msra.mxu0 0.0
        %709 = vmatpush.msra.mxu0 0.0
        %710 = vmatpush.msra.mxu0 0.0
        %711 = vmatpush.msra.mxu0 0.0
        %712 = vmatpush.msra.mxu0 0.0
        %713 = vmatpush.msra.mxu0 0.0
        %714 = vmatpush.msra.mxu0 0.0
        %715 = vmatpush.msra.mxu0 0.0
        %716 = vmatpush.msra.mxu0 0.0
        %717 = vmatpush.msra.mxu0 0.0
        %718 = vmatpush.msra.mxu0 0.0
        %719 = vmatpush.msra.mxu0 0.0
        %720 = vmatpush.msra.mxu0 %v707
        %721 = vmatpush.msra.mxu0 %v706
        %722 = vmatpush.msra.mxu0 %v705
        %723 = vmatpush.msra.mxu0 %v704
        %724 = vmatmul.f32.gmra.mxu0 %v227
        %v725 = vpop.f32.mrf.mxu0
        %v726 = vadd.f32 0.0, %v725
        %727 = vdwg.mxu0
        %s728 = scalar_lea.vmem %s2, 96
        %v729 = vld [vmem:[%s728] sm:$0xff]
        %v730 = vld [vmem:[%s728 + $0x8] sm:$0xff]
        %v731 = vld [vmem:[%s728 + $0x10] sm:$0xff]
        %v732 = vld [vmem:[%s728 + $0x18] sm:$0xff]
        %733 = vmatpush.msra.mxu0 0.0
        %734 = vmatpush.msra.mxu0 0.0
        %735 = vmatpush.msra.mxu0 0.0
        %736 = vmatpush.msra.mxu0 0.0
        %737 = vmatpush.msra.mxu0 0.0
        %738 = vmatpush.msra.mxu0 0.0
        %739 = vmatpush.msra.mxu0 0.0
        %740 = vmatpush.msra.mxu0 0.0
        %741 = vmatpush.msra.mxu0 0.0
        %742 = vmatpush.msra.mxu0 0.0
        %743 = vmatpush.msra.mxu0 0.0
        %744 = vmatpush.msra.mxu0 0.0
        %745 = vmatpush.msra.mxu0 %v732
        %746 = vmatpush.msra.mxu0 %v731
        %747 = vmatpush.msra.mxu0 %v730
        %748 = vmatpush.msra.mxu0 %v729
        %749 = vmatmul.f32.gmra.mxu0 %v227
        %v750 = vpop.f32.mrf.mxu0
        %v751 = vadd.f32 0.0, %v750
        %752 = vdwg.mxu0
        %s753 = scalar_lea.vmem %s3, 96
        %v754 = vld [vmem:[%s753] sm:$0xff]
        %v755 = vld [vmem:[%s753 + $0x8] sm:$0xff]
        %v756 = vld [vmem:[%s753 + $0x10] sm:$0xff]
        %v757 = vld [vmem:[%s753 + $0x18] sm:$0xff]
        %758 = vmatpush.msra.mxu0 0.0
        %759 = vmatpush.msra.mxu0 0.0
        %760 = vmatpush.msra.mxu0 0.0
        %761 = vmatpush.msra.mxu0 0.0
        %762 = vmatpush.msra.mxu0 0.0
        %763 = vmatpush.msra.mxu0 0.0
        %764 = vmatpush.msra.mxu0 0.0
        %765 = vmatpush.msra.mxu0 0.0
        %766 = vmatpush.msra.mxu0 0.0
        %767 = vmatpush.msra.mxu0 0.0
        %768 = vmatpush.msra.mxu0 0.0
        %769 = vmatpush.msra.mxu0 0.0
        %770 = vmatpush.msra.mxu0 %v757
        %771 = vmatpush.msra.mxu0 %v756
        %772 = vmatpush.msra.mxu0 %v755
        %773 = vmatpush.msra.mxu0 %v754
        %774 = vmatmul.f32.gmra.mxu0 %v227
        %v775 = vpop.f32.mrf.mxu0
        %v776 = vadd.f32 0.0, %v775
        %777 = vdwg.mxu0
        %v779 = vsel %vm297, %v726, 0
        %v782 = vsel %vm297, %v751, 0
        %784 = vmatpush.xpose.msra.mxu0 0.0
        %785 = vmatpush.xpose.msra.mxu0 0.0
        %786 = vmatpush.xpose.msra.mxu0 0.0
        %787 = vmatpush.xpose.msra.mxu0 0.0
        %788 = vmatpush.xpose.msra.mxu0 0.0
        %789 = vmatpush.xpose.msra.mxu0 0.0
        %790 = vmatpush.xpose.msra.mxu0 0.0
        %791 = vmatpush.xpose.msra.mxu0 0.0
        %792 = vmatpush.xpose.msra.mxu0 0.0
        %793 = vmatpush.xpose.msra.mxu0 0.0
        %794 = vmatpush.xpose.msra.mxu0 0.0
        %795 = vmatpush.xpose.msra.mxu0 0.0
        %796 = vmatpush.xpose.msra.mxu0 0.0
        %797 = vmatpush.xpose.msra.mxu0 0.0
        %798 = vmatpush.xpose.msra.mxu0 0.0
        %799 = vmatpush.xpose.msra.mxu0 %v782
        %800 = vmatmul.f32.gmra.mxu0 %v779
        %v801 = vpop.f32.mrf.mxu0
        %v802 = vadd.f32 0.0, %v801
        %803 = vdwg.mxu0
        %v804 = vsel %vm297, %v802, -inf
        %805 = vmax.xlane.f32.xlu0 %v804
        %v806 = vpop.xlane.xlu0 %805
        %v807 = vsub.f32 %v802, %v806
        %v808 = vmul.f32 %v807, 1.442695
        %v809 = vpow.pop %v808
        %v810 = vsel %vm297, %v809, 0.0
        %811 = vadd.xlane.f32.xlu0 %v810
        %v812 = vpop.xlane.xlu0 %811
        %v813 = vrcp.pop %v812
        %v814 = vmul.f32 %v809, %v813
        %v816 = vsel %vm297, %v814, 0
        %818 = vmatpush.msra.mxu0 0.0
        %819 = vmatpush.msra.mxu0 0.0
        %820 = vmatpush.msra.mxu0 0.0
        %821 = vmatpush.msra.mxu0 0.0
        %822 = vmatpush.msra.mxu0 0.0
        %823 = vmatpush.msra.mxu0 0.0
        %824 = vmatpush.msra.mxu0 0.0
        %825 = vmatpush.msra.mxu0 0.0
        %826 = vmatpush.msra.mxu0 0.0
        %827 = vmatpush.msra.mxu0 0.0
        %828 = vmatpush.msra.mxu0 0.0
        %829 = vmatpush.msra.mxu0 0.0
        %830 = vmatpush.msra.mxu0 0.0
        %831 = vmatpush.msra.mxu0 0.0
        %832 = vmatpush.msra.mxu0 0.0
        %833 = vmatpush.msra.mxu0 %v776
        %834 = vmatmul.f32.gmra.mxu0 %v816
        %v835 = vpop.f32.mrf.mxu0
        %v836 = vadd.f32 0.0, %v835
        %837 = vdwg.mxu0
        %s838 = scalar_lea.vmem %s4, 24
        %v839 = vld [vmem:[%s838] sm:$0xff]
        %v841 = vsel %vm297, %v836, 0
        %843 = vmatpush.msra.mxu0 0.0
        %844 = vmatpush.msra.mxu0 0.0
        %845 = vmatpush.msra.mxu0 0.0
        %846 = vmatpush.msra.mxu0 0.0
        %847 = vmatpush.msra.mxu0 0.0
        %848 = vmatpush.msra.mxu0 0.0
        %849 = vmatpush.msra.mxu0 0.0
        %850 = vmatpush.msra.mxu0 0.0
        %851 = vmatpush.msra.mxu0 0.0
        %852 = vmatpush.msra.mxu0 0.0
        %853 = vmatpush.msra.mxu0 0.0
        %854 = vmatpush.msra.mxu0 0.0
        %855 = vmatpush.msra.mxu0 0.0
        %856 = vmatpush.msra.mxu0 0.0
        %857 = vmatpush.msra.mxu0 0.0
        %858 = vmatpush.msra.mxu0 %v839
        %859 = vmatmul.f32.gmra.mxu0 %v841
        %v860 = vpop.f32.mrf.mxu0
        %v861 = vadd.f32 0.0, %v860
        %862 = vdwg.mxu0
        %v863 = vadd.f32 %v702, %v861
        %864 = vst.msk [vmem:[%s215] sm:$0xff] %vm225, %v863
        %s865 = sand.u32 %s137, 1
        %s866 = scalar_lea.sflag [#allocation3], %s865
        %s867 = sand.u32 %s137, 1
        %s868 = smul.addr %s867, 8
        %s869 = scalar_lea.vmem [#allocation2], %s868
        // Predicated region
        $region41: #{tpu_custom_call.1} parent=39 // pred_check
          %p870 = pneg %p147
        $region42: #{tpu_custom_call.1} parent=39 // pred_check_branch
          %872 = sbr.rel (%p870) target = $region44
        $region43: #{tpu_custom_call.1} parent=39 // pred_region
          %874 = vsyncadd %s866, 0
          %s875 = smul.addr %s19, 8
          %s876 = scalar_lea.hbm %s5, %s875
          %s878 = sshll.u32 %s869, 4
          %s879 = int_to_ptr.vmem [resolvable:$true] %s878
          %s880 = sshll.u32 %s876, 4
          %s881 = int_to_ptr.hbm [resolvable:$true] %s880
          %883 = dma.vmem_to_hbm [thread:$0]  %s879, 128, %s881, %s866
        $region44: #{tpu_custom_call.1} parent=39 // pred_fallthru
          _
      $region40: #{tpu_custom_call.1} parent=5 // pred_fallthru
        _
      %p884 = scmp.le.s32.totalorder 2, %s14
      // Predicated region
      $region45: #{tpu_custom_call.1} parent=5 // pred_check
        %p885 = pneg %p884
      $region46: #{tpu_custom_call.1} parent=5 // pred_check_branch
        %887 = sbr.rel (%p885) target = $region48
      $region47: #{tpu_custom_call.1} parent=5 // pred_region
        %s888 = ssub.s32 %s14, 2
        // Predicated region
        $region49: #{tpu_custom_call.1} parent=47 // pred_check
          %p889 = pneg %p153
        $region50: #{tpu_custom_call.1} parent=47 // pred_check_branch
          %891 = sbr.rel (%p889) target = $region52
        $region51: #{tpu_custom_call.1} parent=47 // pred_region
          %s892 = sand.u32 %s138, 1
          %s893 = scalar_lea.sflag [#allocation3], %s892
          %s894 = sand.u32 %s138, 1
          %s895 = smul.addr %s894, 8
          %s896 = scalar_lea.vmem [#allocation2], %s895
          %898 = dma.done %s893, 128
        $region52: #{tpu_custom_call.1} parent=47 // pred_fallthru
          _
      $region48: #{tpu_custom_call.1} parent=5 // pred_fallthru
        _
    $region6: #{tpu_custom_call.1} parent=1 // loop_footer
      %s18 = sadd.s32 1, %s14
    $region7: #{tpu_custom_call.1} parent=1 // loop_footer_branch
      %13 = sbr.rel target = $region3
    $region8: #{tpu_custom_call.1} parent=1 // loop_exit
      _
    %899 = vsyncpa [#allocation3], 1
    %s900 = scalar_lea.sflag [#allocation3], 1
    %901 = vsyncpa %s900, 1

</llo_original>
